<compile_context>
chip_gen: v7x
topology: tpu7x:2x2x1
jax: 0.10.0
libtpu: 0.0.40
codegen_flags: <defaults>
</compile_context>

<pallas_src>
import functools
import math

import jax
import jax.numpy as jnp
from jax import lax
from jax.experimental import pallas as pl
from jax.experimental.pallas import tpu as pltpu


_INV_SQRT2 = 1.0 / math.sqrt(2.0)
_TANH_C = 0.7978845608028654  # sqrt(2/pi)


def _round_up(a, b):
    return (a + b - 1) // b * b


def _cdiv(a, b):
    return (a + b - 1) // b


def _pad2d(a, rows, cols):
    pr = rows - a.shape[0]
    pc = cols - a.shape[1]
    if pr == 0 and pc == 0:
        return a
    return jnp.pad(a, ((0, pr), (0, pc)))


def _vmem_capacity_bytes():
    try:
        cap = getattr(pltpu.get_tpu_info(), "vmem_capacity_bytes", None)
        if cap:
            return int(cap)
    except Exception:
        pass
    return 64 * 2**20  # conservative fallback (v7x-sized VMEM)


def _mlp_kernel(x_ref, w1t_ref, b1_ref, w2t_ref, b2_ref, o_ref, *,
                n_chunks, chunk, approximate_gelu):
    # x_ref  : (tm, in_p)        compute dtype (bf16 by default), cast done in wrapper
    # w1t_ref: (in_p, hid_p)     W1^T, VMEM-resident (single-buffered)
    # b1_ref : (1, hid_p)        f32
    # w2t_ref: (hid_p, tn_out)   W2^T, resident (or streamed stripe in fallback mode)
    # b2_ref : (1, tn_out)       f32
    # o_ref  : (tm, tn_out)
    x = x_ref[...]
    acc = jnp.zeros(o_ref.shape, jnp.float32)
    # Static (fully unrolled) chunk loop over the hidden dim: interleaves
    # MXU matmuls with VPU/EUP GELU work and keeps the f32 intermediate small.
    for c in range(n_chunks):
        lo = c * chunk
        h = lax.dot_general(
            x, w1t_ref[:, lo:lo + chunk],
            dimension_numbers=(((1,), (0,)), ((), ())),
            preferred_element_type=jnp.float32,
        )
        h = h + b1_ref[:, lo:lo + chunk]
        if approximate_gelu:
            # tanh-approx GELU (EUP) -- opt-in, slight numerics difference.
            h = 0.5 * h * (1.0 + jnp.tanh(_TANH_C * (h + 0.044715 * h * h * h)))
        else:
            # PyTorch nn.GELU default (approximate='none'), kept in f32.
            h = 0.5 * h * (1.0 + lax.erf(h * _INV_SQRT2))
        acc = acc + lax.dot_general(
            h.astype(w2t_ref.dtype), w2t_ref[lo:lo + chunk, :],
            dimension_numbers=(((1,), (0,)), ((), ())),
            preferred_element_type=jnp.float32,
        )
    o_ref[...] = (acc + b2_ref[...]).astype(o_ref.dtype)


@functools.partial(jax.jit,
                   static_argnames=("tm", "param_dtype", "approximate_gelu"))
def mlp_forward(x, w1, b1, w2, b2, *, tm=None, param_dtype=jnp.bfloat16,
                approximate_gelu=False):
    """Forward pass of the 2-layer Mlp.

    x : (..., in_features)
    w1: (hidden_features, in_features), b1: (hidden_features,)
    w2: (out_features, hidden_features), b2: (out_features,)   (PyTorch nn.Linear layout)
    param_dtype: compute dtype for weights/activations (default bf16, MXU-native);
                 accumulation, biases and GELU stay in float32.
    """
    in_f = x.shape[-1]
    lead = x.shape[:-1]
    n = math.prod(lead) if lead else 1
    hidden = w1.shape[0]
    out_f = w2.shape[0]

    compute_dtype = jnp.dtype(param_dtype)
    w_bytes = compute_dtype.itemsize
    x_bytes = w_bytes

    # Per-generation budgets (trace-time query).
    vmem_cap = _vmem_capacity_bytes()
    small_vmem = vmem_cap <= 64 * 2**20            # v7x-class (64 MiB / TC)
    vmem_budget = (52 if small_vmem else 100) * 2**20
    if tm is None:
        tm = 256 if small_vmem else 512            # v5e/v6e: bigger row tile

    # Lane-dense feature padding (multiples of 128); exact because padded weight
    # rows/cols and biases are zero and GELU(0) == 0.
    in_p = _round_up(in_f, 128)
    hid_p = _round_up(hidden, 128)
    out_p = _round_up(out_f, 128)

    # Hidden-dim chunking (~512 wide).
    n_chunks = max(1, _cdiv(hid_p, 512))
    chunk = _round_up(_cdiv(hid_p, n_chunks), 128)
    hid_p = chunk * n_chunks

    # Row tile: multiple of 128; force >=2 row-grid steps when possible so a
    # 2-TC chip (v7x) can shard the parallel row axis.
    tm_eff = max(128, min(tm, _round_up(n, 128)))
    if n > 128 and _round_up(n, tm_eff) // tm_eff < 2:
        tm_eff = _round_up(_cdiv(n, 2), 128)
    n_p = _round_up(n, tm_eff)
    row_tiles = n_p // tm_eff

    # Fallback: tile the out-feature axis (stream W2^T stripes, keep W1^T resident)
    # if single-buffered resident weights would blow the VMEM budget.
    tn_out = out_p
    if (in_p * hid_p + hid_p * out_p) * w_bytes > vmem_budget // 2 and out_p > 512:
        for cand in (512, 256, 128):
            tn_out = min(cand, out_p)
            if (in_p * hid_p + 2 * hid_p * tn_out) * w_bytes <= vmem_budget // 2:
                break
        out_p = _round_up(out_p, tn_out)
    out_tiles = out_p // tn_out

    # Casts folded into the pad/transpose copies (one-time HBM transforms).
    x2 = _pad2d(x.reshape(n, in_f).astype(compute_dtype), n_p, in_p)
    w1t = _pad2d(w1.T.astype(compute_dtype), in_p, hid_p)   # (in_p, hid_p)
    w2t = _pad2d(w2.T.astype(compute_dtype), hid_p, out_p)  # (hid_p, out_p)
    b1p = _pad2d(b1.astype(jnp.float32).reshape(1, hidden), 1, hid_p)
    b2p = _pad2d(b2.astype(jnp.float32).reshape(1, out_f), 1, out_p)

    kernel = functools.partial(_mlp_kernel, n_chunks=n_chunks, chunk=chunk,
                               approximate_gelu=approximate_gelu)

    resident = pl.Buffered(1)   # fetched once, held in VMEM -- no wasted 2nd buffer
    w1_spec = pl.BlockSpec((in_p, hid_p), lambda j, i: (0, 0), pipeline_mode=resident)
    b1_spec = pl.BlockSpec((1, hid_p), lambda j, i: (0, 0), pipeline_mode=resident)
    if out_tiles == 1:
        w2_spec = pl.BlockSpec((hid_p, tn_out), lambda j, i: (0, j), pipeline_mode=resident)
        b2_spec = pl.BlockSpec((1, tn_out), lambda j, i: (0, j), pipeline_mode=resident)
    else:
        # Streamed stripes: keep default double-buffering to hide the DMA.
        w2_spec = pl.BlockSpec((hid_p, tn_out), lambda j, i: (0, j))
        b2_spec = pl.BlockSpec((1, tn_out), lambda j, i: (0, j))

    cost = pl.CostEstimate(
        flops=2 * n * (in_f * hidden * out_tiles + hidden * out_f),
        transcendentals=n * hidden * out_tiles,
        bytes_accessed=(
            n_p * in_p * x_bytes * out_tiles
            + (in_p * hid_p + hid_p * out_p) * w_bytes
            + (hid_p + out_p) * 4
            + n_p * out_p * jnp.dtype(x.dtype).itemsize
        ),
    )

    out = pl.pallas_call(
        kernel,
        out_shape=jax.ShapeDtypeStruct((n_p, out_p), x.dtype),
        grid_spec=pltpu.PrefetchScalarGridSpec(
            num_scalar_prefetch=0,
            grid=(out_tiles, row_tiles),   # rows innermost (fastest-varying)
            in_specs=[
                pl.BlockSpec((tm_eff, in_p), lambda j, i: (i, 0)),  # x rows (streamed)
                w1_spec,   # W1^T  (VMEM-resident, single-buffered)
                b1_spec,   # b1    (resident)
                w2_spec,   # W2^T  (resident, or streamed stripes in fallback mode)
                b2_spec,   # b2
            ],
            out_specs=pl.BlockSpec((tm_eff, tn_out), lambda j, i: (i, j)),
        ),
        compiler_params=pltpu.CompilerParams(
            dimension_semantics=("parallel", "parallel"),
            vmem_limit_bytes=int(vmem_budget),
        ),
        cost_estimate=cost,
    )(x2, w1t, b1p, w2t, b2p)

    out = out[:n, :out_f]
    return out.reshape(*lead, out_f) if lead else out.reshape(out_f)


def _init_linear(key, out_features, in_features, dtype=jnp.float32):
    # Deterministic init matching nn.Linear's shapes (kaiming-uniform-ish bound).
    kw, kb = jax.random.split(key)
    bound = 1.0 / math.sqrt(in_features)
    w = jax.random.uniform(kw, (out_features, in_features), dtype,
                           minval=-bound, maxval=bound)
    b = jax.random.uniform(kb, (out_features,), dtype,
                           minval=-bound, maxval=bound)
    return w, b


if __name__ == "__main__":
    key = jax.random.PRNGKey(0)
    k_x, k_l1, k_l2 = jax.random.split(key, 3)

    # Small shapes consistent with the module: batch=2, seq=8, features last.
    batch, seq = 2, 8
    in_features, hidden_features, out_features = 16, 32, 16

    x = jax.random.normal(k_x, (batch, seq, in_features), dtype=jnp.float32)
    w1, b1 = _init_linear(k_l1, hidden_features, in_features)
    w2, b2 = _init_linear(k_l2, out_features, hidden_features)

    # Plain-JAX reference of the same forward pass (Linear -> GELU -> Linear).
    h_ref = x @ w1.T + b1
    h_ref = 0.5 * h_ref * (1.0 + lax.erf(h_ref / math.sqrt(2.0)))
    y_ref = h_ref @ w2.T + b2

    # Exact f32 path.
    y32 = jax.block_until_ready(mlp_forward(x, w1, b1, w2, b2, param_dtype=jnp.float32))
    assert y32.shape == (batch, seq, out_features)
    assert jnp.allclose(y32, y_ref, atol=1e-4, rtol=1e-4), "f32 mismatch vs reference"

    # Default bf16 compute path (f32 accumulation) -- looser tolerance.
    y_bf = jax.block_until_ready(mlp_forward(x, w1, b1, w2, b2))
    assert y_bf.shape == (batch, seq, out_features)
    assert jnp.allclose(y_bf.astype(jnp.float32), y_ref, atol=5e-2, rtol=5e-2), \
        "bf16 mismatch vs reference"

    # Opt-in tanh-approx GELU path (exercise the flag; numerics intentionally differ).
    y_tanh = jax.block_until_ready(mlp_forward(x, w1, b1, w2, b2, approximate_gelu=True))
    assert y_tanh.shape == (batch, seq, out_features)

    print("KERNEL_OK")
</pallas_src>

<mosaic_0001>
module attributes {stable_mosaic.version = 11 : i64} {
  func.func @_mlp_kernel(%arg0: i32, %arg1: i32, %arg2: memref<128x128xf32, #tpu.memory_space<vmem>>, %arg3: memref<128x128xf32, #tpu.memory_space<vmem>>, %arg4: memref<1x128xf32, #tpu.memory_space<vmem>>, %arg5: memref<128x128xf32, #tpu.memory_space<vmem>>, %arg6: memref<1x128xf32, #tpu.memory_space<vmem>>, %arg7: memref<128x128xf32, #tpu.memory_space<vmem>>) attributes {dimension_semantics = [#tpu.dimension_semantics<parallel>, #tpu.dimension_semantics<parallel>], iteration_bounds = array<i64: 1, 1>, scalar_prefetch = 0 : i64, scratch_operands = 0 : i64, tpu.core_type = #tpu.core_type<tc>, window_params = [{transform_indices = @transform_0, window_bounds = array<i64: 128, 128>}, {pipeline_mode = #tpu.pipeline_mode<synchronous>, transform_indices = @transform_1, window_bounds = array<i64: 128, 128>}, {pipeline_mode = #tpu.pipeline_mode<synchronous>, transform_indices = @transform_2, window_bounds = array<i64: 1, 128>}, {pipeline_mode = #tpu.pipeline_mode<synchronous>, transform_indices = @transform_3, window_bounds = array<i64: 128, 128>}, {pipeline_mode = #tpu.pipeline_mode<synchronous>, transform_indices = @transform_4, window_bounds = array<i64: 1, 128>}, {transform_indices = @transform_5, window_bounds = array<i64: 128, 128>}]} {
    %c0 = arith.constant 0 : index
    %c0_0 = arith.constant 0 : index
    %0 = vector.load %arg2[%c0, %c0_0] : memref<128x128xf32, #tpu.memory_space<vmem>>, vector<128x128xf32>
    %cst = arith.constant 0.000000e+00 : f32
    %1 = vector.broadcast %cst : f32 to vector<128x128xf32>
    %c0_1 = arith.constant 0 : index
    %c0_2 = arith.constant 0 : index
    %2 = vector.load %arg3[%c0_1, %c0_2] : memref<128x128xf32, #tpu.memory_space<vmem>>, vector<128x128xf32>
    %cst_3 = arith.constant dense<0.000000e+00> : vector<128x128xf32>
    %3 = tpu.matmul %0, %2, %cst_3 {dimension_numbers = #tpu.dot_dimension_numbers<[1], [0], [0], [1], [0, 0, 1, 1], [], []>} : vector<128x128xf32>, vector<128x128xf32>, vector<128x128xf32> -> vector<128x128xf32>
    %c0_4 = arith.constant 0 : index
    %c0_5 = arith.constant 0 : index
    %4 = vector.load %arg4[%c0_4, %c0_5] : memref<1x128xf32, #tpu.memory_space<vmem>>, vector<1x128xf32>
    %5 = vector.broadcast %4 : vector<1x128xf32> to vector<128x128xf32>
    %6 = arith.addf %3, %5 : vector<128x128xf32>
    %cst_6 = arith.constant 5.000000e-01 : f32
    %7 = vector.broadcast %cst_6 : f32 to vector<128x128xf32>
    %8 = arith.mulf %7, %6 : vector<128x128xf32>
    %cst_7 = arith.constant 0.707106769 : f32
    %9 = vector.broadcast %cst_7 : f32 to vector<128x128xf32>
    %10 = arith.mulf %6, %9 : vector<128x128xf32>
    %11 = math.erf %10 : vector<128x128xf32>
    %cst_8 = arith.constant 1.000000e+00 : f32
    %12 = vector.broadcast %cst_8 : f32 to vector<128x128xf32>
    %13 = arith.addf %12, %11 : vector<128x128xf32>
    %14 = arith.mulf %8, %13 : vector<128x128xf32>
    %c0_9 = arith.constant 0 : index
    %c0_10 = arith.constant 0 : index
    %15 = vector.load %arg5[%c0_9, %c0_10] : memref<128x128xf32, #tpu.memory_space<vmem>>, vector<128x128xf32>
    %cst_11 = arith.constant dense<0.000000e+00> : vector<128x128xf32>
    %16 = tpu.matmul %14, %15, %cst_11 {dimension_numbers = #tpu.dot_dimension_numbers<[1], [0], [0], [1], [0, 0, 1, 1], [], []>} : vector<128x128xf32>, vector<128x128xf32>, vector<128x128xf32> -> vector<128x128xf32>
    %17 = arith.addf %1, %16 : vector<128x128xf32>
    %c0_12 = arith.constant 0 : index
    %c0_13 = arith.constant 0 : index
    %18 = vector.load %arg6[%c0_12, %c0_13] : memref<1x128xf32, #tpu.memory_space<vmem>>, vector<1x128xf32>
    %19 = vector.broadcast %18 : vector<1x128xf32> to vector<128x128xf32>
    %20 = arith.addf %17, %19 : vector<128x128xf32>
    %c0_14 = arith.constant 0 : index
    %c0_15 = arith.constant 0 : index
    %21 = vector.load %arg7[%c0_14, %c0_15] : memref<128x128xf32, #tpu.memory_space<vmem>>, vector<128x128xf32>
    tpu.vector_store %arg7[%c0_14, %c0_15], %20 {strides = array<i32>} : memref<128x128xf32, #tpu.memory_space<vmem>>, vector<128x128xf32>,
    return
  }
  func.func @transform_0(%arg0: i32, %arg1: i32) -> (i32, i32) {
    %c0_i32 = arith.constant 0 : i32
    %c0_i32_0 = arith.constant 0 : i32
    return %arg1, %c0_i32 : i32, i32
  }
  func.func @transform_1(%arg0: i32, %arg1: i32) -> (i32, i32) {
    %c0_i32 = arith.constant 0 : i32
    %c0_i32_0 = arith.constant 0 : i32
    %c0_i32_1 = arith.constant 0 : i32
    return %c0_i32, %c0_i32_0 : i32, i32
  }
  func.func @transform_2(%arg0: i32, %arg1: i32) -> (i32, i32) {
    %c0_i32 = arith.constant 0 : i32
    %c0_i32_0 = arith.constant 0 : i32
    %c0_i32_1 = arith.constant 0 : i32
    return %c0_i32, %c0_i32_0 : i32, i32
  }
  func.func @transform_3(%arg0: i32, %arg1: i32) -> (i32, i32) {
    %c0_i32 = arith.constant 0 : i32
    %c0_i32_0 = arith.constant 0 : i32
    return %c0_i32, %arg0 : i32, i32
  }
  func.func @transform_4(%arg0: i32, %arg1: i32) -> (i32, i32) {
    %c0_i32 = arith.constant 0 : i32
    %c0_i32_0 = arith.constant 0 : i32
    return %c0_i32, %arg0 : i32, i32
  }
  func.func @transform_5(%arg0: i32, %arg1: i32) -> (i32, i32) {
    %c0_i32 = arith.constant 0 : i32
    return %arg1, %arg0 : i32, i32
  }
}

</mosaic_0001>

<llo_original>
// kernel: mlp_forward.1
$region0: #{mlp_forward.1}
  #allocation0 [shape = 'u32[]', space=smem, size = 0x4, offset = 0x4, fixed_abs, tag = 'smem constant byte address 0x4 - core index']
  #allocation1 [shape = 'u32[144,128]{1,0:T(1,128)}', space=vmem, size = 0x12000, scoped, tag = 'internal scratch']
  %s0 = inlined_call_operand.vmem [shape: f32[128,128], index: 0, kind: input, shape index: {}]
  %s1 = inlined_call_operand.vmem [shape: f32[128,128], index: 1, kind: input, shape index: {}]
  %s2 = inlined_call_operand.vmem [shape: f32[1,128], index: 2, kind: input, shape index: {}]
  %s3 = inlined_call_operand.vmem [shape: f32[128,128], index: 3, kind: input, shape index: {}]
  %s4 = inlined_call_operand.vmem [shape: f32[1,128], index: 4, kind: input, shape index: {}]
  %s5 = inlined_call_operand.vmem [shape: f32[128,128], index: 5, kind: output, shape index: {}]
  %s6 = sld [smem:[#allocation0]]
  $region30: #{mlp_forward.1} parent=0
    _
  %s8 = ssub.s32 1, %s6
  %s9 = scalar_select 0, %s8, %s6
  // Predicated region
  $region2: #{mlp_forward.1} parent=0 // pred_check
    _
  $region3: #{mlp_forward.1} parent=0 // pred_check_branch
    %11 = sbr.rel (0) target = $region5
  $region4: #{mlp_forward.1} parent=0 // pred_region
    _
  $region5: #{mlp_forward.1} parent=0 // pred_fallthru
    _
  // Predicated region
  $region6: #{mlp_forward.1} parent=0 // pred_check
    _
  $region7: #{mlp_forward.1} parent=0 // pred_check_branch
    %13 = sbr.rel (0) target = $region9
  $region8: #{mlp_forward.1} parent=0 // pred_region
    _
  $region9: #{mlp_forward.1} parent=0 // pred_fallthru
    _
  // Predicated region
  $region10: #{mlp_forward.1} parent=0 // pred_check
    _
  $region11: #{mlp_forward.1} parent=0 // pred_check_branch
    %15 = sbr.rel (0) target = $region13
  $region12: #{mlp_forward.1} parent=0 // pred_region
    _
  $region13: #{mlp_forward.1} parent=0 // pred_fallthru
    _
  // Predicated region
  $region14: #{mlp_forward.1} parent=0 // pred_check
    _
  $region15: #{mlp_forward.1} parent=0 // pred_check_branch
    %17 = sbr.rel (0) target = $region17
  $region16: #{mlp_forward.1} parent=0 // pred_region
    _
  $region17: #{mlp_forward.1} parent=0 // pred_fallthru
    _
  // Predicated region
  $region18: #{mlp_forward.1} parent=0 // pred_check
    _
  $region19: #{mlp_forward.1} parent=0 // pred_check_branch
    %19 = sbr.rel (0) target = $region21
  $region20: #{mlp_forward.1} parent=0 // pred_region
    _
  $region21: #{mlp_forward.1} parent=0 // pred_fallthru
    _
  %v20 = vld [vmem:[%s0] sm:$0xff]
  %v21 = vld [vmem:[%s0 + $0x8] sm:$0xff]
  %v22 = vld [vmem:[%s0 + $0x10] sm:$0xff]
  %v23 = vld [vmem:[%s0 + $0x18] sm:$0xff]
  %v24 = vld [vmem:[%s0 + $0x20] sm:$0xff]
  %v25 = vld [vmem:[%s0 + $0x28] sm:$0xff]
  %v26 = vld [vmem:[%s0 + $0x30] sm:$0xff]
  %v27 = vld [vmem:[%s0 + $0x38] sm:$0xff]
  %v28 = vld [vmem:[%s0 + $0x40] sm:$0xff]
  %v29 = vld [vmem:[%s0 + $0x48] sm:$0xff]
  %v30 = vld [vmem:[%s0 + $0x50] sm:$0xff]
  %v31 = vld [vmem:[%s0 + $0x58] sm:$0xff]
  %v32 = vld [vmem:[%s0 + $0x60] sm:$0xff]
  %v33 = vld [vmem:[%s0 + $0x68] sm:$0xff]
  %v34 = vld [vmem:[%s0 + $0x70] sm:$0xff]
  %v35 = vld [vmem:[%s0 + $0x78] sm:$0xff]
  %v36 = vld [vmem:[%s1] sm:$0xff]
  %v37 = vld [vmem:[%s1 + $0x8] sm:$0xff]
  %v38 = vld [vmem:[%s1 + $0x10] sm:$0xff]
  %v39 = vld [vmem:[%s1 + $0x18] sm:$0xff]
  %v40 = vld [vmem:[%s1 + $0x20] sm:$0xff]
  %v41 = vld [vmem:[%s1 + $0x28] sm:$0xff]
  %v42 = vld [vmem:[%s1 + $0x30] sm:$0xff]
  %v43 = vld [vmem:[%s1 + $0x38] sm:$0xff]
  %v44 = vld [vmem:[%s1 + $0x40] sm:$0xff]
  %v45 = vld [vmem:[%s1 + $0x48] sm:$0xff]
  %v46 = vld [vmem:[%s1 + $0x50] sm:$0xff]
  %v47 = vld [vmem:[%s1 + $0x58] sm:$0xff]
  %v48 = vld [vmem:[%s1 + $0x60] sm:$0xff]
  %v49 = vld [vmem:[%s1 + $0x68] sm:$0xff]
  %v50 = vld [vmem:[%s1 + $0x70] sm:$0xff]
  %v51 = vld [vmem:[%s1 + $0x78] sm:$0xff]
  %v52 = vld [vmem:[%s2] sm:$0x1]
  %v54 = vlaneseq
  %v55 = vshrl.u32 %v54, 7
  %v56 = vsub.s32 0, %v55
  %v57 = vrot.slane %v52, %v56
  %59 = vmatprep.subr.mxu0 0.0
  %60 = vmatpush1.msra.mxu0 %v36
  %61 = vmatprep.subr.mxu0 0.0
  %62 = vmatpush1.msra.mxu0 %v37
  %63 = vmatprep.subr.mxu0 0.0
  %64 = vmatpush1.msra.mxu0 %v38
  %65 = vmatprep.subr.mxu0 0.0
  %66 = vmatpush1.msra.mxu0 %v39
  %67 = vmatprep.subr.mxu0 0.0
  %68 = vmatpush1.msra.mxu0 %v40
  %69 = vmatprep.subr.mxu0 0.0
  %70 = vmatpush1.msra.mxu0 %v41
  %71 = vmatprep.subr.mxu0 0.0
  %72 = vmatpush1.msra.mxu0 %v42
  %73 = vmatprep.subr.mxu0 0.0
  %74 = vmatpush1.msra.mxu0 %v43
  %75 = vmatprep.subr.mxu0 0.0
  %76 = vmatpush1.msra.mxu0 %v44
  %77 = vmatprep.subr.mxu0 0.0
  %78 = vmatpush1.msra.mxu0 %v45
  %79 = vmatprep.subr.mxu0 0.0
  %80 = vmatpush1.msra.mxu0 %v46
  %81 = vmatprep.subr.mxu0 0.0
  %82 = vmatpush1.msra.mxu0 %v47
  %83 = vmatprep.subr.mxu0 0.0
  %84 = vmatpush1.msra.mxu0 %v48
  %85 = vmatprep.subr.mxu0 0.0
  %86 = vmatpush1.msra.mxu0 %v49
  %87 = vmatprep.subr.mxu0 0.0
  %88 = vmatpush1.msra.mxu0 %v50
  %89 = vmatprep.subr.mxu0 0.0
  %90 = vmatpush1.msra.mxu0 %v51
  %91 = vmatprep.subr.mxu0 0.0
  %92 = vmatpush1.msra.mxu0 0.0
  %93 = vmatprep.subr.mxu0 0.0
  %94 = vmatpush1.msra.mxu0 0.0
  %95 = vmatprep.subr.mxu0 0.0
  %96 = vmatpush1.msra.mxu0 0.0
  %97 = vmatprep.subr.mxu0 0.0
  %98 = vmatpush1.msra.mxu0 0.0
  %99 = vmatprep.subr.mxu0 0.0
  %100 = vmatpush1.msra.mxu0 0.0
  %101 = vmatprep.subr.mxu0 0.0
  %102 = vmatpush1.msra.mxu0 0.0
  %103 = vmatprep.subr.mxu0 0.0
  %104 = vmatpush1.msra.mxu0 0.0
  %105 = vmatprep.subr.mxu0 0.0
  %106 = vmatpush1.msra.mxu0 0.0
  %107 = vmatprep.subr.mxu0 0.0
  %108 = vmatpush1.msra.mxu0 0.0
  %109 = vmatprep.subr.mxu0 0.0
  %110 = vmatpush1.msra.mxu0 0.0
  %111 = vmatprep.subr.mxu0 0.0
  %112 = vmatpush1.msra.mxu0 0.0
  %113 = vmatprep.subr.mxu0 0.0
  %114 = vmatpush1.msra.mxu0 0.0
  %115 = vmatprep.subr.mxu0 0.0
  %116 = vmatpush1.msra.mxu0 0.0
  %117 = vmatprep.subr.mxu0 0.0
  %118 = vmatpush1.msra.mxu0 0.0
  %119 = vmatprep.subr.mxu0 0.0
  %120 = vmatpush1.msra.mxu0 0.0
  %121 = vmatprep.subr.mxu0 0.0
  %122 = vmatpush1.msra.mxu0 0.0
  %123 = vmatprep.mubr.f32.mxu0 0.0
  %124 = vmatmul.mubr.f32.gmra.mrb[0].mxu0 %v20
  %v125 = vpop.f32.mrb[0].mxu0
  %v126 = vadd.f32 %v57, %v125
  %v127 = vpop.f32.mrb[0].mxu0
  %128 = vmatprep.mubr.f32.mxu0 0.0
  %129 = vmatmul.mubr.f32.gmra.mrb[0].mxu0 %v21
  %v130 = vpop.f32.mrb[0].mxu0
  %v131 = vadd.f32 %v57, %v130
  %v132 = vpop.f32.mrb[0].mxu0
  %133 = vmatprep.mubr.f32.mxu0 0.0
  %134 = vmatmul.mubr.f32.gmra.mrb[0].mxu0 %v22
  %v135 = vpop.f32.mrb[0].mxu0
  %v136 = vadd.f32 %v57, %v135
  %v137 = vpop.f32.mrb[0].mxu0
  %138 = vmatprep.mubr.f32.mxu0 0.0
  %139 = vmatmul.mubr.f32.gmra.mrb[0].mxu0 %v23
  %v140 = vpop.f32.mrb[0].mxu0
  %v141 = vadd.f32 %v57, %v140
  %v142 = vpop.f32.mrb[0].mxu0
  %143 = vmatprep.mubr.f32.mxu0 0.0
  %144 = vmatmul.mubr.f32.gmra.mrb[0].mxu0 %v24
  %v145 = vpop.f32.mrb[0].mxu0
  %v146 = vadd.f32 %v57, %v145
  %v147 = vpop.f32.mrb[0].mxu0
  %148 = vmatprep.mubr.f32.mxu0 0.0
  %149 = vmatmul.mubr.f32.gmra.mrb[0].mxu0 %v25
  %v150 = vpop.f32.mrb[0].mxu0
  %v151 = vadd.f32 %v57, %v150
  %v152 = vpop.f32.mrb[0].mxu0
  %153 = vmatprep.mubr.f32.mxu0 0.0
  %154 = vmatmul.mubr.f32.gmra.mrb[0].mxu0 %v26
  %v155 = vpop.f32.mrb[0].mxu0
  %v156 = vadd.f32 %v57, %v155
  %v157 = vpop.f32.mrb[0].mxu0
  %158 = vmatprep.mubr.f32.mxu0 0.0
  %159 = vmatmul.mubr.f32.gmra.mrb[0].mxu0 %v27
  %v160 = vpop.f32.mrb[0].mxu0
  %v161 = vadd.f32 %v57, %v160
  %v162 = vpop.f32.mrb[0].mxu0
  %163 = vmatprep.mubr.f32.mxu0 0.0
  %164 = vmatmul.mubr.f32.gmra.mrb[0].mxu0 %v28
  %v165 = vpop.f32.mrb[0].mxu0
  %v166 = vadd.f32 %v57, %v165
  %v167 = vpop.f32.mrb[0].mxu0
  %168 = vmatprep.mubr.f32.mxu0 0.0
  %169 = vmatmul.mubr.f32.gmra.mrb[0].mxu0 %v29
  %v170 = vpop.f32.mrb[0].mxu0
  %v171 = vadd.f32 %v57, %v170
  %v172 = vpop.f32.mrb[0].mxu0
  %173 = vmatprep.mubr.f32.mxu0 0.0
  %174 = vmatmul.mubr.f32.gmra.mrb[0].mxu0 %v30
  %v175 = vpop.f32.mrb[0].mxu0
  %v176 = vadd.f32 %v57, %v175
  %v177 = vpop.f32.mrb[0].mxu0
  %178 = vmatprep.mubr.f32.mxu0 0.0
  %179 = vmatmul.mubr.f32.gmra.mrb[0].mxu0 %v31
  %v180 = vpop.f32.mrb[0].mxu0
  %v181 = vadd.f32 %v57, %v180
  %v182 = vpop.f32.mrb[0].mxu0
  %183 = vmatprep.mubr.f32.mxu0 0.0
  %184 = vmatmul.mubr.f32.gmra.mrb[0].mxu0 %v32
  %v185 = vpop.f32.mrb[0].mxu0
  %v186 = vadd.f32 %v57, %v185
  %v187 = vpop.f32.mrb[0].mxu0
  %188 = vmatprep.mubr.f32.mxu0 0.0
  %189 = vmatmul.mubr.f32.gmra.mrb[0].mxu0 %v33
  %v190 = vpop.f32.mrb[0].mxu0
  %v191 = vadd.f32 %v57, %v190
  %v192 = vpop.f32.mrb[0].mxu0
  %193 = vmatprep.mubr.f32.mxu0 0.0
  %194 = vmatmul.mubr.f32.gmra.mrb[0].mxu0 %v34
  %v195 = vpop.f32.mrb[0].mxu0
  %v196 = vadd.f32 %v57, %v195
  %v197 = vpop.f32.mrb[0].mxu0
  %198 = vmatprep.mubr.f32.mxu0 0.0
  %199 = vmatmul.mubr.f32.gmra.mrb[0].mxu0 %v35
  %v200 = vpop.f32.mrb[0].mxu0
  %v201 = vadd.f32 %v57, %v200
  %v202 = vpop.f32.mrb[0].mxu0
  %203 = vdwg.mxu0
  %v204 = vmul.f32 %v126, 0.5
  %v205 = vmul.f32 %v131, 0.5
  %v206 = vmul.f32 %v136, 0.5
  %v207 = vmul.f32 %v141, 0.5
  %v208 = vmul.f32 %v146, 0.5
  %v209 = vmul.f32 %v151, 0.5
  %v210 = vmul.f32 %v156, 0.5
  %v211 = vmul.f32 %v161, 0.5
  %v212 = vmul.f32 %v166, 0.5
  %v213 = vmul.f32 %v171, 0.5
  %v214 = vmul.f32 %v176, 0.5
  %v215 = vmul.f32 %v181, 0.5
  %v216 = vmul.f32 %v186, 0.5
  %v217 = vmul.f32 %v191, 0.5
  %v218 = vmul.f32 %v196, 0.5
  %v219 = vmul.f32 %v201, 0.5
  %v220 = vmul.f32 %v126, 0.70710677
  %v221 = vmul.f32 %v131, 0.70710677
  %v222 = vmul.f32 %v136, 0.70710677
  %v223 = vmul.f32 %v141, 0.70710677
  %v224 = vmul.f32 %v146, 0.70710677
  %v225 = vmul.f32 %v151, 0.70710677
  %v226 = vmul.f32 %v156, 0.70710677
  %v227 = vmul.f32 %v161, 0.70710677
  %v228 = vmul.f32 %v166, 0.70710677
  %v229 = vmul.f32 %v171, 0.70710677
  %v230 = vmul.f32 %v176, 0.70710677
  %v231 = vmul.f32 %v181, 0.70710677
  %v232 = vmul.f32 %v186, 0.70710677
  %v233 = vmul.f32 %v191, 0.70710677
  %v234 = vmul.f32 %v196, 0.70710677
  %v235 = vmul.f32 %v201, 0.70710677
  %v236 = verf.f32.pop %v220
  %v237 = verf.f32.pop %v221
  %v238 = verf.f32.pop %v222
  %v239 = verf.f32.pop %v223
  %v240 = verf.f32.pop %v224
  %v241 = verf.f32.pop %v225
  %v242 = verf.f32.pop %v226
  %v243 = verf.f32.pop %v227
  %v244 = verf.f32.pop %v228
  %v245 = verf.f32.pop %v229
  %v246 = verf.f32.pop %v230
  %v247 = verf.f32.pop %v231
  %v248 = verf.f32.pop %v232
  %v249 = verf.f32.pop %v233
  %v250 = verf.f32.pop %v234
  %v251 = verf.f32.pop %v235
  %v252 = vadd.f32 %v236, 1.0
  %v253 = vadd.f32 %v237, 1.0
  %v254 = vadd.f32 %v238, 1.0
  %v255 = vadd.f32 %v239, 1.0
  %v256 = vadd.f32 %v240, 1.0
  %v257 = vadd.f32 %v241, 1.0
  %v258 = vadd.f32 %v242, 1.0
  %v259 = vadd.f32 %v243, 1.0
  %v260 = vadd.f32 %v244, 1.0
  %v261 = vadd.f32 %v245, 1.0
  %v262 = vadd.f32 %v246, 1.0
  %v263 = vadd.f32 %v247, 1.0
  %v264 = vadd.f32 %v248, 1.0
  %v265 = vadd.f32 %v249, 1.0
  %v266 = vadd.f32 %v250, 1.0
  %v267 = vadd.f32 %v251, 1.0
  %v268 = vmul.f32 %v204, %v252
  %v269 = vmul.f32 %v205, %v253
  %v270 = vmul.f32 %v206, %v254
  %v271 = vmul.f32 %v207, %v255
  %v272 = vmul.f32 %v208, %v256
  %v273 = vmul.f32 %v209, %v257
  %v274 = vmul.f32 %v210, %v258
  %v275 = vmul.f32 %v211, %v259
  %v276 = vmul.f32 %v212, %v260
  %v277 = vmul.f32 %v213, %v261
  %v278 = vmul.f32 %v214, %v262
  %v279 = vmul.f32 %v215, %v263
  %v280 = vmul.f32 %v216, %v264
  %v281 = vmul.f32 %v217, %v265
  %v282 = vmul.f32 %v218, %v266
  %v283 = vmul.f32 %v219, %v267
  %v284 = vld [vmem:[%s3] sm:$0xff]
  %v285 = vld [vmem:[%s3 + $0x8] sm:$0xff]
  %v286 = vld [vmem:[%s3 + $0x10] sm:$0xff]
  %v287 = vld [vmem:[%s3 + $0x18] sm:$0xff]
  %v288 = vld [vmem:[%s3 + $0x20] sm:$0xff]
  %v289 = vld [vmem:[%s3 + $0x28] sm:$0xff]
  %v290 = vld [vmem:[%s3 + $0x30] sm:$0xff]
  %v291 = vld [vmem:[%s3 + $0x38] sm:$0xff]
  %v292 = vld [vmem:[%s3 + $0x40] sm:$0xff]
  %v293 = vld [vmem:[%s3 + $0x48] sm:$0xff]
  %v294 = vld [vmem:[%s3 + $0x50] sm:$0xff]
  %v295 = vld [vmem:[%s3 + $0x58] sm:$0xff]
  %v296 = vld [vmem:[%s3 + $0x60] sm:$0xff]
  %v297 = vld [vmem:[%s3 + $0x68] sm:$0xff]
  %v298 = vld [vmem:[%s3 + $0x70] sm:$0xff]
  %v299 = vld [vmem:[%s3 + $0x78] sm:$0xff]
  %v300 = vld [vmem:[%s4] sm:$0x1]
  %v302 = vlaneseq
  %v303 = vshrl.u32 %v302, 7
  %v304 = vsub.s32 0, %v303
  %v305 = vrot.slane %v300, %v304
  %307 = vmatprep.subr.mxu0 0.0
  %308 = vmatpush1.msra.mxu0 %v284
  %309 = vmatprep.subr.mxu0 0.0
  %310 = vmatpush1.msra.mxu0 %v285
  %311 = vmatprep.subr.mxu0 0.0
  %312 = vmatpush1.msra.mxu0 %v286
  %313 = vmatprep.subr.mxu0 0.0
  %314 = vmatpush1.msra.mxu0 %v287
  %315 = vmatprep.subr.mxu0 0.0
  %316 = vmatpush1.msra.mxu0 %v288
  %317 = vmatprep.subr.mxu0 0.0
  %318 = vmatpush1.msra.mxu0 %v289
  %319 = vmatprep.subr.mxu0 0.0
  %320 = vmatpush1.msra.mxu0 %v290
  %321 = vmatprep.subr.mxu0 0.0
  %322 = vmatpush1.msra.mxu0 %v291
  %323 = vmatprep.subr.mxu0 0.0
  %324 = vmatpush1.msra.mxu0 %v292
  %325 = vmatprep.subr.mxu0 0.0
  %326 = vmatpush1.msra.mxu0 %v293
  %327 = vmatprep.subr.mxu0 0.0
  %328 = vmatpush1.msra.mxu0 %v294
  %329 = vmatprep.subr.mxu0 0.0
  %330 = vmatpush1.msra.mxu0 %v295
  %331 = vmatprep.subr.mxu0 0.0
  %332 = vmatpush1.msra.mxu0 %v296
  %333 = vmatprep.subr.mxu0 0.0
  %334 = vmatpush1.msra.mxu0 %v297
  %335 = vmatprep.subr.mxu0 0.0
  %336 = vmatpush1.msra.mxu0 %v298
  %337 = vmatprep.subr.mxu0 0.0
  %338 = vmatpush1.msra.mxu0 %v299
  %339 = vmatprep.subr.mxu0 0.0
  %340 = vmatpush1.msra.mxu0 0.0
  %341 = vmatprep.subr.mxu0 0.0
  %342 = vmatpush1.msra.mxu0 0.0
  %343 = vmatprep.subr.mxu0 0.0
  %344 = vmatpush1.msra.mxu0 0.0
  %345 = vmatprep.subr.mxu0 0.0
  %346 = vmatpush1.msra.mxu0 0.0
  %347 = vmatprep.subr.mxu0 0.0
  %348 = vmatpush1.msra.mxu0 0.0
  %349 = vmatprep.subr.mxu0 0.0
  %350 = vmatpush1.msra.mxu0 0.0
  %351 = vmatprep.subr.mxu0 0.0
  %352 = vmatpush1.msra.mxu0 0.0
  %353 = vmatprep.subr.mxu0 0.0
  %354 = vmatpush1.msra.mxu0 0.0
  %355 = vmatprep.subr.mxu0 0.0
  %356 = vmatpush1.msra.mxu0 0.0
  %357 = vmatprep.subr.mxu0 0.0
  %358 = vmatpush1.msra.mxu0 0.0
  %359 = vmatprep.subr.mxu0 0.0
  %360 = vmatpush1.msra.mxu0 0.0
  %361 = vmatprep.subr.mxu0 0.0
  %362 = vmatpush1.msra.mxu0 0.0
  %363 = vmatprep.subr.mxu0 0.0
  %364 = vmatpush1.msra.mxu0 0.0
  %365 = vmatprep.subr.mxu0 0.0
  %366 = vmatpush1.msra.mxu0 0.0
  %367 = vmatprep.subr.mxu0 0.0
  %368 = vmatpush1.msra.mxu0 0.0
  %369 = vmatprep.subr.mxu0 0.0
  %370 = vmatpush1.msra.mxu0 0.0
  %371 = vmatprep.mubr.f32.mxu0 0.0
  %372 = vmatmul.mubr.f32.gmra.mrb[0].mxu0 %v268
  %v373 = vpop.f32.mrb[0].mxu0
  %v374 = vadd.f32 %v305, %v373
  %v375 = vpop.f32.mrb[0].mxu0
  %376 = vmatprep.mubr.f32.mxu0 0.0
  %377 = vmatmul.mubr.f32.gmra.mrb[0].mxu0 %v269
  %v378 = vpop.f32.mrb[0].mxu0
  %v379 = vadd.f32 %v305, %v378
  %v380 = vpop.f32.mrb[0].mxu0
  %381 = vmatprep.mubr.f32.mxu0 0.0
  %382 = vmatmul.mubr.f32.gmra.mrb[0].mxu0 %v270
  %v383 = vpop.f32.mrb[0].mxu0
  %v384 = vadd.f32 %v305, %v383
  %v385 = vpop.f32.mrb[0].mxu0
  %386 = vmatprep.mubr.f32.mxu0 0.0
  %387 = vmatmul.mubr.f32.gmra.mrb[0].mxu0 %v271
  %v388 = vpop.f32.mrb[0].mxu0
  %v389 = vadd.f32 %v305, %v388
  %v390 = vpop.f32.mrb[0].mxu0
  %391 = vmatprep.mubr.f32.mxu0 0.0
  %392 = vmatmul.mubr.f32.gmra.mrb[0].mxu0 %v272
  %v393 = vpop.f32.mrb[0].mxu0
  %v394 = vadd.f32 %v305, %v393
  %v395 = vpop.f32.mrb[0].mxu0
  %396 = vmatprep.mubr.f32.mxu0 0.0
  %397 = vmatmul.mubr.f32.gmra.mrb[0].mxu0 %v273
  %v398 = vpop.f32.mrb[0].mxu0
  %v399 = vadd.f32 %v305, %v398
  %v400 = vpop.f32.mrb[0].mxu0
  %401 = vmatprep.mubr.f32.mxu0 0.0
  %402 = vmatmul.mubr.f32.gmra.mrb[0].mxu0 %v274
  %v403 = vpop.f32.mrb[0].mxu0
  %v404 = vadd.f32 %v305, %v403
  %v405 = vpop.f32.mrb[0].mxu0
  %406 = vmatprep.mubr.f32.mxu0 0.0
  %407 = vmatmul.mubr.f32.gmra.mrb[0].mxu0 %v275
  %v408 = vpop.f32.mrb[0].mxu0
  %v409 = vadd.f32 %v305, %v408
  %v410 = vpop.f32.mrb[0].mxu0
  %411 = vmatprep.mubr.f32.mxu0 0.0
  %412 = vmatmul.mubr.f32.gmra.mrb[0].mxu0 %v276
  %v413 = vpop.f32.mrb[0].mxu0
  %v414 = vadd.f32 %v305, %v413
  %v415 = vpop.f32.mrb[0].mxu0
  %416 = vmatprep.mubr.f32.mxu0 0.0
  %417 = vmatmul.mubr.f32.gmra.mrb[0].mxu0 %v277
  %v418 = vpop.f32.mrb[0].mxu0
  %v419 = vadd.f32 %v305, %v418
  %v420 = vpop.f32.mrb[0].mxu0
  %421 = vmatprep.mubr.f32.mxu0 0.0
  %422 = vmatmul.mubr.f32.gmra.mrb[0].mxu0 %v278
  %v423 = vpop.f32.mrb[0].mxu0
  %v424 = vadd.f32 %v305, %v423
  %v425 = vpop.f32.mrb[0].mxu0
  %426 = vmatprep.mubr.f32.mxu0 0.0
  %427 = vmatmul.mubr.f32.gmra.mrb[0].mxu0 %v279
  %v428 = vpop.f32.mrb[0].mxu0
  %v429 = vadd.f32 %v305, %v428
  %v430 = vpop.f32.mrb[0].mxu0
  %431 = vmatprep.mubr.f32.mxu0 0.0
  %432 = vmatmul.mubr.f32.gmra.mrb[0].mxu0 %v280
  %v433 = vpop.f32.mrb[0].mxu0
  %v434 = vadd.f32 %v305, %v433
  %v435 = vpop.f32.mrb[0].mxu0
  %436 = vmatprep.mubr.f32.mxu0 0.0
  %437 = vmatmul.mubr.f32.gmra.mrb[0].mxu0 %v281
  %v438 = vpop.f32.mrb[0].mxu0
  %v439 = vadd.f32 %v305, %v438
  %v440 = vpop.f32.mrb[0].mxu0
  %441 = vmatprep.mubr.f32.mxu0 0.0
  %442 = vmatmul.mubr.f32.gmra.mrb[0].mxu0 %v282
  %v443 = vpop.f32.mrb[0].mxu0
  %v444 = vadd.f32 %v305, %v443
  %v445 = vpop.f32.mrb[0].mxu0
  %446 = vmatprep.mubr.f32.mxu0 0.0
  %447 = vmatmul.mubr.f32.gmra.mrb[0].mxu0 %v283
  %v448 = vpop.f32.mrb[0].mxu0
  %v449 = vadd.f32 %v305, %v448
  %v450 = vpop.f32.mrb[0].mxu0
  %451 = vdwg.mxu0
  %452 = vst [vmem:[%s5] sm:$0xff] %v374
  %453 = vst [vmem:[%s5 + $0x8] sm:$0xff] %v379
  %454 = vst [vmem:[%s5 + $0x10] sm:$0xff] %v384
  %455 = vst [vmem:[%s5 + $0x18] sm:$0xff] %v389
  %456 = vst [vmem:[%s5 + $0x20] sm:$0xff] %v394
  %457 = vst [vmem:[%s5 + $0x28] sm:$0xff] %v399
  %458 = vst [vmem:[%s5 + $0x30] sm:$0xff] %v404
  %459 = vst [vmem:[%s5 + $0x38] sm:$0xff] %v409
  %460 = vst [vmem:[%s5 + $0x40] sm:$0xff] %v414
  %461 = vst [vmem:[%s5 + $0x48] sm:$0xff] %v419
  %462 = vst [vmem:[%s5 + $0x50] sm:$0xff] %v424
  %463 = vst [vmem:[%s5 + $0x58] sm:$0xff] %v429
  %464 = vst [vmem:[%s5 + $0x60] sm:$0xff] %v434
  %465 = vst [vmem:[%s5 + $0x68] sm:$0xff] %v439
  %466 = vst [vmem:[%s5 + $0x70] sm:$0xff] %v444
  %467 = vst [vmem:[%s5 + $0x78] sm:$0xff] %v449
  // Predicated region
  $region22: #{mlp_forward.1} parent=0 // pred_check
    _
  $region23: #{mlp_forward.1} parent=0 // pred_check_branch
    %469 = sbr.rel (0) target = $region25
  $region24: #{mlp_forward.1} parent=0 // pred_region
    _
  $region25: #{mlp_forward.1} parent=0 // pred_fallthru
    _
  // Predicated region
  $region26: #{mlp_forward.1} parent=0 // pred_check
    _
  $region27: #{mlp_forward.1} parent=0 // pred_check_branch
    %471 = sbr.rel (0) target = $region29
  $region28: #{mlp_forward.1} parent=0 // pred_region
    _
  $region29: #{mlp_forward.1} parent=0 // pred_fallthru
    _

</llo_original>
